<compile_context>
chip_gen: v5e
topology: v5e:2x2
jax: 0.10.0
libtpu: 0.0.40
codegen_flags: <defaults>
</compile_context>

<pallas_src>
import functools

import jax
import jax.numpy as jnp
from jax.experimental import pallas as pl
from jax.experimental.pallas import tpu as pltpu


def _round_up(x: int, m: int) -> int:
    return ((x + m - 1) // m) * m


def _mpc_fused_kernel(x0_ref, p_ref, w_ref, u_ref, v_ref, *, nx: int, nu: int):
    """One grid step: in-kernel activation assembly + one fused MXU matmul.

    x0_ref: (TB, NX)            initial-state tile
    p_ref:  (TB, NP)            global-parameter tile
    w_ref:  (NX+NP, NX+NU+1)    packed weight slab (VMEM-resident across grid)
    u_ref:  (TB, NU)            u0* output tile        (narrow, lane-masked store)
    v_ref:  (TB, 1)             V   output tile
    """
    x0 = x0_ref[...]                                    # (TB, NX)
    p = p_ref[...]                                      # (TB, NP)

    # Assemble the activation row [x0 | p] in registers — no padded HBM slab.
    acts = jnp.concatenate([x0, p], axis=-1)            # (TB, NX+NP)

    # Single MXU matmul. Column layout of y (MUST match pack_mpc_solution_weights):
    #   cols 0:nx        -> 0.5 * x0 @ P      (quadratic intermediate)
    #   cols nx:nx+nu    -> u0 = x0 @ K^T + p @ L^T
    #   col  nx+nu       -> p @ q             (linear value term)
    y = jnp.dot(acts, w_ref[...], preferred_element_type=jnp.float32)

    quad = jnp.sum(y[:, :nx] * x0, axis=-1, keepdims=True)          # (TB, 1), XLU reduce
    u_ref[...] = y[:, nx:nx + nu].astype(u_ref.dtype)
    v_ref[...] = (quad + y[:, nx + nu:nx + nu + 1]).astype(v_ref.dtype)


def pack_mpc_solution_weights(K, L, P, q):
    """Pack (K, L, P, q) into one (NX+NP, NX+NU+1) MXU weight slab.

    Do this ONCE if K/L/P/q are constant across forward calls.

    INVARIANTS the kernel relies on (do not reorder without editing the kernel):
      rows 0:NX      = x0 contribution, rows NX:NX+NP = p_global contribution
      cols 0:NX      = 0.5*P   (zero below row NX)
      cols NX:NX+NU  = K^T / L^T
      col  NX+NU     = q       (zero above row NX)
    """
    K = jnp.asarray(K, jnp.float32)
    L = jnp.asarray(L, jnp.float32)
    P = jnp.asarray(P, jnp.float32)
    q_vec = jnp.asarray(q, jnp.float32).reshape(-1)

    NU, NX = K.shape
    NP_ = L.shape[1]
    assert L.shape[0] == NU, "K and L must agree on NU"
    assert P.shape == (NX, NX), "P must be (NX, NX)"
    assert q_vec.shape[0] == NP_, "q must have NP elements"

    in_w = NX + NP_
    out_w = NX + NU + 1
    W = jnp.zeros((in_w, out_w), jnp.float32)
    W = W.at[:NX, :NX].set(0.5 * P)            # quadratic block (0.5 folded in)
    W = W.at[:NX, NX:NX + NU].set(K.T)         # feedback
    W = W.at[NX:, NX:NX + NU].set(L.T)         # feedforward
    W = W.at[NX:, NX + NU].set(q_vec)          # linear value column
    return W


def mpc_solution_forward(x0, p_global, K, L, P, q, *,
                         packed_w=None, tile_b=2048,
                         small_batch_threshold=256, force_pallas=False,
                         materialize_du0_dp_global=True):
    """Pallas-backed forward pass of MpcSolutionModule (u0=None branch).

    Returns (mpc_output, mpc_state, stats) mimicking the torch module:
      mpc_output = {"u0": (B,NU), "Q": None, "V": (B,), "status": (B,) int8,
                    "du0_dp_global": (B,NU,NP) (or constant (NU,NP) if
                    materialize_du0_dp_global=False)}
    """
    B, NX = x0.shape
    NP_ = p_global.shape[1]
    K32 = jnp.asarray(K, jnp.float32)
    L32 = jnp.asarray(L, jnp.float32)
    P32 = jnp.asarray(P, jnp.float32)
    q32 = jnp.asarray(q, jnp.float32).reshape(-1)
    NU = K32.shape[0]
    dtype = x0.dtype

    if B == 0:
        # Guarded edge case: empty batch, no kernel launch.
        u0 = jnp.zeros((0, NU), dtype)
        value = jnp.zeros((0,), dtype)
    elif B <= small_batch_threshold and not force_pallas:
        # Small-batch fast path: at tiny B the Pallas path is pure launch /
        # padding overhead; two tiny fused XLA matmuls are faster.
        x32 = x0.astype(jnp.float32)
        p32 = p_global.astype(jnp.float32)
        u0 = (x32 @ K32.T + p32 @ L32.T).astype(dtype)
        value = (0.5 * jnp.einsum("bi,ij,bj->b", x32, P32, x32)
                 + p32 @ q32).astype(dtype)
    else:
        W = pack_mpc_solution_weights(K32, L32, P32, q32) if packed_w is None else packed_w
        in_w, out_w = W.shape
        assert (in_w, out_w) == (NX + NP_, NX + NU + 1), "packed_w shape mismatch"

        # Batch tiling: big tiles amortize the ~0.35 us per-step grid overhead;
        # cap so there are >= 2 grid steps when possible (v7x megacore).
        b8 = _round_up(B, 8)
        tb = max(8, min(_round_up(tile_b, 8), b8))
        if tb >= b8 and b8 >= 16:
            tb = _round_up((b8 + 1) // 2, 8)
        b_pad = _round_up(b8, tb)
        grid = b_pad // tb

        x32 = x0.astype(jnp.float32)
        p32 = p_global.astype(jnp.float32)
        if b_pad != B:
            x32 = jnp.pad(x32, ((0, b_pad - B), (0, 0)))   # zero rows -> zero outputs
            p32 = jnp.pad(p32, ((0, b_pad - B), (0, 0)))

        kernel = functools.partial(_mpc_fused_kernel, nx=NX, nu=NU)

        u_out, v_out = pl.pallas_call(
            kernel,
            out_shape=(
                jax.ShapeDtypeStruct((b_pad, NU), jnp.float32),
                jax.ShapeDtypeStruct((b_pad, 1), jnp.float32),
            ),
            grid_spec=pltpu.PrefetchScalarGridSpec(
                num_scalar_prefetch=0,
                grid=(grid,),
                in_specs=[
                    pl.BlockSpec((tb, NX), lambda i: (i, 0)),        # x0 tile
                    pl.BlockSpec((tb, NP_), lambda i: (i, 0)),       # p_global tile
                    pl.BlockSpec((in_w, out_w), lambda i: (0, 0)),   # weights (resident)
                ],
                out_specs=[
                    pl.BlockSpec((tb, NU), lambda i: (i, 0)),        # u0*
                    pl.BlockSpec((tb, 1), lambda i: (i, 0)),         # V
                ],
            ),
            compiler_params=pltpu.CompilerParams(
                dimension_semantics=("parallel",),
                vmem_limit_bytes=32 * 1024 * 1024),                  # v5e default is 16 MiB
        )(x32, p32, W)

        u0 = u_out[:B].astype(dtype)
        value = v_out[:B, 0].astype(dtype)

    status = jnp.zeros((B,), dtype=jnp.int8)                         # all "converged"

    # du0/dp_global is the constant L for every batch element.
    if materialize_du0_dp_global:
        du0_dp_global = jnp.broadcast_to(L32.astype(dtype)[None, :, :], (B, NU, NP_))
    else:
        du0_dp_global = L32.astype(dtype)                            # (NU, NP)

    mpc_output = {
        "u0": u0,
        "Q": None,           # u0 was not provided -> value is V, Q is None
        "V": value,
        "status": status,
        "du0_dp_global": du0_dp_global,
    }
    mpc_state = None         # TODO(synk): acados batched solver iterates not emulated
    stats = {}               # TODO(synk): mpc.last_call_stats not emulated
    return mpc_output, mpc_state, stats


def _reference_forward(x0, p_global, K, L, P, q):
    """Pure-JAX reference for correctness checking."""
    u0 = x0 @ K.T + p_global @ L.T
    v = 0.5 * jnp.einsum("bi,ij,bj->b", x0, P, x0) + p_global @ q.reshape(-1)
    return u0, v


if __name__ == "__main__":
    B, NX, NU, NP_ = 8, 16, 8, 16

    key = jax.random.PRNGKey(0)
    k_x0, k_p, k_K, k_L, k_A, k_q, k_x2, k_p2 = jax.random.split(key, 8)

    # Inputs (deterministic).
    x0 = jax.random.normal(k_x0, (B, NX), dtype=jnp.float32)
    p_global = jax.random.normal(k_p, (B, NP_), dtype=jnp.float32)

    # Deterministic synthetic "solver" parameters (shapes implied by the LQ-MPC
    # solution map of the module's forward pass).
    K = 0.1 * jax.random.normal(k_K, (NU, NX), dtype=jnp.float32)
    L = 0.1 * jax.random.normal(k_L, (NU, NP_), dtype=jnp.float32)
    A = jax.random.normal(k_A, (NX, NX), dtype=jnp.float32)
    P = A @ A.T / NX + jnp.eye(NX, dtype=jnp.float32)   # symmetric PSD Hessian
    q = 0.05 * jax.random.normal(k_q, (NP_, 1), dtype=jnp.float32)

    # Pack the constant solver gains once; reuse across forward calls.
    W_packed = pack_mpc_solution_weights(K, L, P, q)

    # --- Pallas path (forced, since B is tiny) --------------------------------
    mpc_output, mpc_state, stats = mpc_solution_forward(
        x0, p_global, K, L, P, q, packed_w=W_packed, force_pallas=True)
    jax.block_until_ready(mpc_output["u0"])
    jax.block_until_ready(mpc_output["V"])

    u_ref, v_ref = _reference_forward(x0, p_global, K, L, P, q)
    assert mpc_output["u0"].shape == (B, NU)
    assert mpc_output["V"].shape == (B,)
    assert mpc_output["status"].dtype == jnp.int8
    assert mpc_output["Q"] is None
    assert mpc_output["du0_dp_global"].shape == (B, NU, NP_)
    assert jnp.allclose(mpc_output["du0_dp_global"],
                        jnp.broadcast_to(L[None], (B, NU, NP_)))
    assert jnp.allclose(mpc_output["u0"], u_ref, atol=1e-4, rtol=1e-4), (
        jnp.max(jnp.abs(mpc_output["u0"] - u_ref)))
    assert jnp.allclose(mpc_output["V"], v_ref, atol=1e-4, rtol=1e-4), (
        jnp.max(jnp.abs(mpc_output["V"] - v_ref)))

    # --- Pallas path, multi-tile grid + row padding (B=24 -> 2 steps of 16) ---
    B2 = 24
    x0_2 = jax.random.normal(k_x2, (B2, NX), dtype=jnp.float32)
    p_2 = jax.random.normal(k_p2, (B2, NP_), dtype=jnp.float32)
    out2, _, _ = mpc_solution_forward(
        x0_2, p_2, K, L, P, q, packed_w=W_packed, force_pallas=True)
    jax.block_until_ready(out2["u0"])
    u_ref2, v_ref2 = _reference_forward(x0_2, p_2, K, L, P, q)
    assert out2["u0"].shape == (B2, NU) and out2["V"].shape == (B2,)
    assert jnp.allclose(out2["u0"], u_ref2, atol=1e-4, rtol=1e-4)
    assert jnp.allclose(out2["V"], v_ref2, atol=1e-4, rtol=1e-4)

    # --- Small-batch fast path (no pallas_call) matches too -------------------
    out_fast, _, _ = mpc_solution_forward(
        x0, p_global, K, L, P, q, packed_w=W_packed,
        materialize_du0_dp_global=False)
    assert out_fast["du0_dp_global"].shape == (NU, NP_)
    assert jnp.allclose(out_fast["u0"], u_ref, atol=1e-4, rtol=1e-4)
    assert jnp.allclose(out_fast["V"], v_ref, atol=1e-4, rtol=1e-4)

    print("KERNEL_OK")
</pallas_src>

<mosaic_0001>
module attributes {stable_mosaic.version = 11 : i64} {
  func.func @_mpc_fused_kernel(%arg0: i32, %arg1: memref<8x16xf32, #tpu.memory_space<vmem>>, %arg2: memref<8x16xf32, #tpu.memory_space<vmem>>, %arg3: memref<32x25xf32, #tpu.memory_space<vmem>>, %arg4: memref<8x8xf32, #tpu.memory_space<vmem>>, %arg5: memref<8x1xf32, #tpu.memory_space<vmem>>) attributes {dimension_semantics = [#tpu.dimension_semantics<parallel>], iteration_bounds = array<i64: 1>, scalar_prefetch = 0 : i64, scratch_operands = 0 : i64, tpu.core_type = #tpu.core_type<tc>, window_params = [{transform_indices = @transform_0, window_bounds = array<i64: 8, 16>}, {transform_indices = @transform_1, window_bounds = array<i64: 8, 16>}, {pipeline_mode = #tpu.pipeline_mode<synchronous>, transform_indices = @transform_2, window_bounds = array<i64: 32, 25>}, {transform_indices = @transform_3, window_bounds = array<i64: 8, 8>}, {transform_indices = @transform_4, window_bounds = array<i64: 8, 1>}]} {
    %c0 = arith.constant 0 : index
    %c0_0 = arith.constant 0 : index
    %0 = vector.load %arg1[%c0, %c0_0] : memref<8x16xf32, #tpu.memory_space<vmem>>, vector<8x16xf32>
    %c0_1 = arith.constant 0 : index
    %c0_2 = arith.constant 0 : index
    %1 = vector.load %arg2[%c0_1, %c0_2] : memref<8x16xf32, #tpu.memory_space<vmem>>, vector<8x16xf32>
    %2 = tpu.concatenate %0, %1 in 1 : vector<8x16xf32>, vector<8x16xf32> -> vector<8x32xf32>
    %c0_3 = arith.constant 0 : index
    %c0_4 = arith.constant 0 : index
    %3 = vector.load %arg3[%c0_3, %c0_4] : memref<32x25xf32, #tpu.memory_space<vmem>>, vector<32x25xf32>
    %cst = arith.constant dense<0.000000e+00> : vector<8x25xf32>
    %4 = tpu.matmul %2, %3, %cst {dimension_numbers = #tpu.dot_dimension_numbers<[1], [0], [0], [1], [0, 0, 1, 1], [], []>} : vector<8x32xf32>, vector<32x25xf32>, vector<8x25xf32> -> vector<8x25xf32>
    %5 = vector.extract_strided_slice %4 {offsets = [0, 0], sizes = [8, 16], strides = [1, 1]} : vector<8x25xf32> to vector<8x16xf32>
    %6 = arith.mulf %5, %0 : vector<8x16xf32>
    %cst_5 = arith.constant dense<0.000000e+00> : vector<8xf32>
    %7 = vector.multi_reduction <add>, %6, %cst_5 [1] : vector<8x16xf32> to vector<8xf32>
    %8 = vector.shape_cast %7 : vector<8xf32> to vector<8x1xf32>
    %9 = vector.extract_strided_slice %4 {offsets = [0, 16], sizes = [8, 8], strides = [1, 1]} : vector<8x25xf32> to vector<8x8xf32>
    %c0_6 = arith.constant 0 : index
    %c0_7 = arith.constant 0 : index
    %10 = vector.load %arg4[%c0_6, %c0_7] : memref<8x8xf32, #tpu.memory_space<vmem>>, vector<8x8xf32>
    tpu.vector_store %arg4[%c0_6, %c0_7], %9 {strides = array<i32>} : memref<8x8xf32, #tpu.memory_space<vmem>>, vector<8x8xf32>,
    %11 = vector.extract_strided_slice %4 {offsets = [0, 24], sizes = [8, 1], strides = [1, 1]} : vector<8x25xf32> to vector<8x1xf32>
    %12 = arith.addf %8, %11 : vector<8x1xf32>
    %c0_8 = arith.constant 0 : index
    %c0_9 = arith.constant 0 : index
    %13 = vector.load %arg5[%c0_8, %c0_9] : memref<8x1xf32, #tpu.memory_space<vmem>>, vector<8x1xf32>
    tpu.vector_store %arg5[%c0_8, %c0_9], %12 {strides = array<i32>} : memref<8x1xf32, #tpu.memory_space<vmem>>, vector<8x1xf32>,
    return
  }
  func.func @transform_0(%arg0: i32) -> (i32, i32) {
    %c0_i32 = arith.constant 0 : i32
    %c0_i32_0 = arith.constant 0 : i32
    return %arg0, %c0_i32 : i32, i32
  }
  func.func @transform_1(%arg0: i32) -> (i32, i32) {
    %c0_i32 = arith.constant 0 : i32
    %c0_i32_0 = arith.constant 0 : i32
    return %arg0, %c0_i32 : i32, i32
  }
  func.func @transform_2(%arg0: i32) -> (i32, i32) {
    %c0_i32 = arith.constant 0 : i32
    %c0_i32_0 = arith.constant 0 : i32
    %c0_i32_1 = arith.constant 0 : i32
    return %c0_i32, %c0_i32_0 : i32, i32
  }
  func.func @transform_3(%arg0: i32) -> (i32, i32) {
    %c0_i32 = arith.constant 0 : i32
    %c0_i32_0 = arith.constant 0 : i32
    return %arg0, %c0_i32 : i32, i32
  }
  func.func @transform_4(%arg0: i32) -> (i32, i32) {
    %c0_i32 = arith.constant 0 : i32
    %c0_i32_0 = arith.constant 0 : i32
    return %arg0, %c0_i32 : i32, i32
  }
}

</mosaic_0001>

<llo_original>
// kernel: tpu_custom_call.1
$region0: #{tpu_custom_call.1}
  #allocation0 [shape = 'u32[]', space=smem, size = 0x4, offset = 0x4, fixed_abs, tag = 'smem constant byte address 0x4 - core index']
  #allocation1 [shape = 'u32[72,128]{1,0:T(1,128)}', space=vmem, size = 0x9000, scoped, tag = 'internal scratch']
  %s0 = inlined_call_operand.hbm [shape: f32[8,16], index: 0, kind: input, shape index: {}]
  %s1 = inlined_call_operand.hbm [shape: f32[8,16], index: 1, kind: input, shape index: {}]
  %s2 = inlined_call_operand.hbm [shape: f32[32,25], index: 2, kind: input, shape index: {}]
  %s3 = inlined_call_operand.hbm [shape: f32[8,8], index: 3, kind: output, shape index: {0}]
  %s4 = inlined_call_operand.vmem [shape: f32[8,1], index: 4, kind: output, shape index: {1}]
  %5 = xla_tuple %s3, %s4
  %s6 = sld [smem:[#allocation0]]
  $region42: #{tpu_custom_call.1} parent=0
    _
  %s8 = ssub.s32 1, %s6
  %s9 = scalar_select 0, %s8, %s6
  $region1: #{tpu_custom_call.1} parent=0
    #allocation2 [shape = 'u8[4096]{0}', space=vmem, size = 0x1000, scoped, tag = 'input window, operand 0, single buffered']
    #allocation3 [shape = 's32[1]{0}', space=sflag, size = 0x4, scoped, tag = 'scoped memory for tpu_custom_call.1']
    #allocation4 [shape = 's32[1]{0}', space=sflag, size = 0x4, scoped, tag = 'scoped memory for tpu_custom_call.1']
    #allocation5 [shape = 'u8[4096]{0}', space=vmem, size = 0x1000, scoped, tag = 'input window, operand 1, single buffered']
    #allocation6 [shape = 's32[1]{0}', space=sflag, size = 0x4, scoped, tag = 'scoped memory for tpu_custom_call.1']
    #allocation7 [shape = 'u8[16384]{0}', space=vmem, size = 0x4000, scoped, tag = 'input window, operand 2, single buffered']
    #allocation8 [shape = 'u8[4096]{0}', space=vmem, size = 0x1000, scoped, tag = 'output window, operand 0, single buffered']
    %10 = vsyncpa [#allocation3], 0
    %11 = vsyncpa [#allocation6], 0
    %12 = vsyncpa [#allocation4], 0
    // Predicated region
    $region2: #{tpu_custom_call.1} parent=1 // pred_check
      _
    $region3: #{tpu_custom_call.1} parent=1 // pred_check_branch
      %14 = sbr.rel (0) target = $region5
    $region4: #{tpu_custom_call.1} parent=1 // pred_region
      %16 = vsyncadd [#allocation3], 0
      %s18 = sshll.u32 %s0, 4
      %s19 = int_to_ptr.hbm [resolvable:$true] %s18
      %s20 = sshll.u32 [#allocation2], 4
      %s21 = int_to_ptr.vmem [resolvable:$true] %s20
      %23 = dma.hbm_to_vmem [thread:$0]  %s19, 128, %s21, [#allocation3]
    $region5: #{tpu_custom_call.1} parent=1 // pred_fallthru
      _
    // Predicated region
    $region6: #{tpu_custom_call.1} parent=1 // pred_check
      _
    $region7: #{tpu_custom_call.1} parent=1 // pred_check_branch
      %25 = sbr.rel (0) target = $region9
    $region8: #{tpu_custom_call.1} parent=1 // pred_region
      %27 = vsyncadd [#allocation6], 0
      %s29 = sshll.u32 %s1, 4
      %s30 = int_to_ptr.hbm [resolvable:$true] %s29
      %s31 = sshll.u32 [#allocation5], 4
      %s32 = int_to_ptr.vmem [resolvable:$true] %s31
      %34 = dma.hbm_to_vmem [thread:$0]  %s30, 128, %s32, [#allocation6]
    $region9: #{tpu_custom_call.1} parent=1 // pred_fallthru
      _
    // Predicated region
    $region10: #{tpu_custom_call.1} parent=1 // pred_check
      _
    $region11: #{tpu_custom_call.1} parent=1 // pred_check_branch
      %36 = sbr.rel (0) target = $region13
    $region12: #{tpu_custom_call.1} parent=1 // pred_region
      %38 = vsyncadd [#allocation6], 0
      %s39 = sshll.u32 %s2, 4
      %s40 = int_to_ptr.hbm [resolvable:$true] %s39
      %s41 = sshll.u32 [#allocation7], 4
      %s42 = int_to_ptr.vmem [resolvable:$true] %s41
      %47 = dma.hbm_to_vmem [thread:$0]  %s40, 512, %s42, [#allocation6], 128, 128, 8
    $region13: #{tpu_custom_call.1} parent=1 // pred_fallthru
      _
    // Predicated region
    $region14: #{tpu_custom_call.1} parent=1 // pred_check
      _
    $region15: #{tpu_custom_call.1} parent=1 // pred_check_branch
      %49 = sbr.rel (0) target = $region17
    $region16: #{tpu_custom_call.1} parent=1 // pred_region
      %51 = dma.done [#allocation3], 128
    $region17: #{tpu_custom_call.1} parent=1 // pred_fallthru
      _
    // Predicated region
    $region18: #{tpu_custom_call.1} parent=1 // pred_check
      _
    $region19: #{tpu_custom_call.1} parent=1 // pred_check_branch
      %53 = sbr.rel (0) target = $region21
    $region20: #{tpu_custom_call.1} parent=1 // pred_region
      %55 = dma.done [#allocation6], 128
    $region21: #{tpu_custom_call.1} parent=1 // pred_fallthru
      _
    // Predicated region
    $region22: #{tpu_custom_call.1} parent=1 // pred_check
      _
    $region23: #{tpu_custom_call.1} parent=1 // pred_check_branch
      %57 = sbr.rel (0) target = $region25
    $region24: #{tpu_custom_call.1} parent=1 // pred_region
      %59 = dma.done [#allocation6], 512
    $region25: #{tpu_custom_call.1} parent=1 // pred_fallthru
      _
    %v60 = vld [vmem:[#allocation2] sm:$0xff]
    %v61 = vld [vmem:[#allocation5] sm:$0xff]
    %63 = vrot.lane.b32.xlu0 %v61, 16
    %v64 = vpop.permute.xlu0 %63
    %vm66 = vcmask 130048
    %v67 = vsel %vm66, %v60, %v64
    %v68 = vld [vmem:[#allocation7] sm:$0xff]
    %v69 = vld [vmem:[#allocation7 + $0x8] sm:$0xff]
    %v70 = vld [vmem:[#allocation7 + $0x10] sm:$0xff]
    %v71 = vld [vmem:[#allocation7 + $0x18] sm:$0xff]
    %vm72 = vcmask 261120
    %v74 = vsel %vm72, %v67, 0
    %76 = vmatpush.msra.mxu0 0.0
    %77 = vmatpush.msra.mxu0 0.0
    %78 = vmatpush.msra.mxu0 0.0
    %79 = vmatpush.msra.mxu0 0.0
    %80 = vmatpush.msra.mxu0 0.0
    %81 = vmatpush.msra.mxu0 0.0
    %82 = vmatpush.msra.mxu0 0.0
    %83 = vmatpush.msra.mxu0 0.0
    %84 = vmatpush.msra.mxu0 0.0
    %85 = vmatpush.msra.mxu0 0.0
    %86 = vmatpush.msra.mxu0 0.0
    %87 = vmatpush.msra.mxu0 0.0
    %88 = vmatpush.msra.mxu0 %v71
    %89 = vmatpush.msra.mxu0 %v70
    %90 = vmatpush.msra.mxu0 %v69
    %91 = vmatpush.msra.mxu0 %v68
    %92 = vmatmul.f32.gmra.mxu0 %v74
    %v93 = vpop.f32.mrf.mxu0
    %v94 = vadd.f32 0.0, %v93
    %95 = vdwg.mxu0
    %v96 = vmul.f32 %v94, %v60
    %v97 = vsel %vm66, %v96, 0.0
    %98 = vadd.xlane.f32.xlu0 %v97
    %v99 = vpop.xlane.xlu0 %98
    %101 = vrot.lane.b32.xlu0 %v94, 112
    %v102 = vpop.permute.xlu0 %101
    %vm104 = vcmask 64512
    %105 = vst.msk [vmem:[#allocation8] sm:$0xff] %vm104, %v102
    %v106 = vadd.f32 %v99, %v94
    %108 = vrot.lane.b32.xlu0 %v106, 104
    %v109 = vpop.permute.xlu0 %108
    %vm111 = vcmask 7168
    %112 = vst.msk [vmem:[%s4] sm:$0xff] %vm111, %v109
    // Predicated region
    $region26: #{tpu_custom_call.1} parent=1 // pred_check
      _
    $region27: #{tpu_custom_call.1} parent=1 // pred_check_branch
      %114 = sbr.rel (0) target = $region29
    $region28: #{tpu_custom_call.1} parent=1 // pred_region
      %116 = vsyncadd [#allocation4], 0
      %s118 = sshll.u32 [#allocation8], 4
      %s119 = int_to_ptr.vmem [resolvable:$true] %s118
      %s120 = sshll.u32 %s3, 4
      %s121 = int_to_ptr.hbm [resolvable:$true] %s120
      %123 = dma.vmem_to_hbm [thread:$0]  %s119, 128, %s121, [#allocation4]
    $region29: #{tpu_custom_call.1} parent=1 // pred_fallthru
      _
    // Predicated region
    $region30: #{tpu_custom_call.1} parent=1 // pred_check
      _
    $region31: #{tpu_custom_call.1} parent=1 // pred_check_branch
      %125 = sbr.rel (0) target = $region33
    $region32: #{tpu_custom_call.1} parent=1 // pred_region
      _
    $region33: #{tpu_custom_call.1} parent=1 // pred_fallthru
      _
    // Predicated region
    $region34: #{tpu_custom_call.1} parent=1 // pred_check
      _
    $region35: #{tpu_custom_call.1} parent=1 // pred_check_branch
      %127 = sbr.rel (0) target = $region37
    $region36: #{tpu_custom_call.1} parent=1 // pred_region
      %129 = dma.done [#allocation4], 128
    $region37: #{tpu_custom_call.1} parent=1 // pred_fallthru
      _
    // Predicated region
    $region38: #{tpu_custom_call.1} parent=1 // pred_check
      _
    $region39: #{tpu_custom_call.1} parent=1 // pred_check_branch
      %131 = sbr.rel (0) target = $region41
    $region40: #{tpu_custom_call.1} parent=1 // pred_region
      _
    $region41: #{tpu_custom_call.1} parent=1 // pred_fallthru
      _
    %132 = vsyncpa [#allocation3], 1
    %133 = vsyncpa [#allocation6], 1
    %134 = vsyncpa [#allocation4], 1

</llo_original>
